<compile_context>
chip_gen: v5e
topology: v5e:2x2
jax: 0.10.0
libtpu: 0.0.40
codegen_flags: <defaults>
</compile_context>

<pallas_src>
from functools import partial

import jax
import jax.numpy as jnp
from jax.experimental import pallas as pl
from jax.experimental.pallas import tpu as pltpu


def _round_up(x, m):
    return (x + m - 1) // m * m


def _resident_spec(shape):
    """Constant-index (VMEM-resident) operand; single-buffered when supported."""
    buffered = getattr(pl, "Buffered", None)
    if buffered is not None:
        try:
            return pl.BlockSpec(shape, lambda i: (0, 0), pipeline_mode=buffered(1))
        except TypeError:
            pass
    return pl.BlockSpec(shape, lambda i: (0, 0))


def _vmem_limit_bytes(state_dim, h0, h1, tile_b, compute_dtype, act_dtype):
    ci = jnp.dtype(compute_dtype).itemsize
    ai = jnp.dtype(act_dtype).itemsize
    x_b = 2 * state_dim * tile_b * ci            # double-buffered streamed x tile
    o_b = 2 * 8 * tile_b * 4                     # (1,TB) out block, sublane-padded
    h_b = (h0 + h1) * tile_b * (4 + ai)          # f32 pre-activation + tanh temp
    est = 2 * (x_b + o_b + h_b) + (4 << 20)
    return int(min(max(est, 32 << 20), 64 << 20))


def value_net_kernel(x_ref, w1_ref, b1_ref, w2_ref, b2_ref, w3_ref, b3_ref,
                     o_ref, *, act_dtype):
    x = x_ref[...]                                               # (S, TB)

    # Layer 1: MXU matmul, f32 accumulate; tanh in act_dtype (bf16 on v6e/v7x
    # halves the EUP cost, which is the binding slot of this kernel).
    h1 = jnp.dot(w1_ref[...], x, preferred_element_type=jnp.float32)
    h1 = jnp.tanh((h1 + b1_ref[...]).astype(act_dtype))          # (H0, TB)

    # Layer 2.
    h2 = jnp.dot(w2_ref[...], h1.astype(w2_ref.dtype),
                 preferred_element_type=jnp.float32)
    h2 = jnp.tanh((h2 + b2_ref[...]).astype(act_dtype))          # (H1, TB)

    # Layer 3 (value head, out_dim = 1): keep it off the MXU.
    # VPU elementwise multiply + cross-sublane (XLU) reduce, f32.
    w3 = w3_ref[...].astype(jnp.float32)                         # (H1, 1)
    v = jnp.sum(h2.astype(jnp.float32) * w3, axis=0, keepdims=True)
    o_ref[...] = (v + b3_ref[...]).astype(o_ref.dtype)           # (1, TB)


def value_network_forward(state, params, *, tile_b=16384,
                          compute_dtype=jnp.float32, act_dtype=None):
    """state: (B, state_dim) float32. Returns (B, 1) float32.

    params: PyTorch-native layout — w{i}: (out, in), b{i}: (out, 1).
    compute_dtype: dtype of the MXU operand stream (bf16 is fine on v5e/v6e/v7x,
      accumulation stays f32).
    act_dtype: dtype the tanh runs in (defaults to compute_dtype; bf16 here is
      the v6e/v7x EUP win — keep f32 on v5e).
    """
    B, state_dim = state.shape
    if act_dtype is None:
        act_dtype = compute_dtype

    w1, b1 = params["w1"], params["b1"]          # (H0, S),  (H0, 1)
    w2, b2 = params["w2"], params["b2"]          # (H1, H0), (H1, 1)
    w3, b3 = params["w3"], params["b3"]          # (1, H1),  (1, 1)
    H0, H1 = w1.shape[0], w2.shape[0]

    # Lane-dense batch tile: multiple of 128, clamped to the padded batch; when
    # the batch allows, keep >=2 grid steps so v7x's two TensorCores both run.
    b128 = _round_up(B, 128)
    tb = max(128, min(_round_up(tile_b, 128), b128))
    if b128 > 128 and tb >= b128:
        tb = _round_up(b128 // 2, 128)
    Bp = _round_up(B, tb)
    grid = (Bp // tb,)

    # Single fused pad + cast + transpose into batch-on-lanes layout (S, Bp).
    xT = jnp.pad(state.astype(compute_dtype), ((0, Bp - B), (0, 0))).T

    w1c = w1.astype(compute_dtype)
    w2c = w2.astype(compute_dtype)
    w3c = w3.T.astype(compute_dtype)             # (H1, 1) for the mul+reduce head

    out = pl.pallas_call(
        partial(value_net_kernel, act_dtype=act_dtype),
        out_shape=jax.ShapeDtypeStruct((1, Bp), jnp.float32),
        grid=grid,
        in_specs=[
            pl.BlockSpec((state_dim, tb), lambda i: (0, i)),     # streamed x tile
            _resident_spec(w1c.shape), _resident_spec(b1.shape),
            _resident_spec(w2c.shape), _resident_spec(b2.shape),
            _resident_spec(w3c.shape), _resident_spec(b3.shape),
        ],
        out_specs=pl.BlockSpec((1, tb), lambda i: (0, i)),
        compiler_params=pltpu.CompilerParams(
            dimension_semantics=("parallel",),
            vmem_limit_bytes=_vmem_limit_bytes(
                state_dim, H0, H1, tb, compute_dtype, act_dtype)),
    )(xT, w1c, b1, w2c, b2, w3c, b3)

    return out[:, :B].T                                          # (B, 1)


def init_params(key, state_dim, hidden_dim=(64, 64)):
    """PyTorch nn.Linear-style init (uniform +-1/sqrt(fan_in)).

    Weights stored PyTorch-native: (out_dim, in_dim); biases as (out_dim, 1).
    """
    H0, H1 = hidden_dim
    shapes = [(H0, state_dim), (H1, H0), (1, H1)]
    params = {}
    for i, (fan_out, fan_in) in enumerate(shapes, start=1):
        key, kw, kb = jax.random.split(key, 3)
        bound = 1.0 / jnp.sqrt(fan_in)
        params[f"w{i}"] = jax.random.uniform(
            kw, (fan_out, fan_in), jnp.float32, -bound, bound)
        params[f"b{i}"] = jax.random.uniform(
            kb, (fan_out, 1), jnp.float32, -bound, bound)
    return params


def value_network_ref(state, params):
    """Pure-JAX reference (matches the PyTorch forward)."""
    h = jnp.tanh(state @ params["w1"].T + params["b1"].T)
    h = jnp.tanh(h @ params["w2"].T + params["b2"].T)
    return h @ params["w3"].T + params["b3"].T


if __name__ == "__main__":
    key = jax.random.PRNGKey(0)
    k_x, k_p = jax.random.split(key)

    batch = 8
    state_dim = 4
    hidden_dim = (32, 32)

    state = jax.random.normal(k_x, (batch, state_dim), jnp.float32)
    params = init_params(k_p, state_dim, hidden_dim)
    ref = value_network_ref(state, params)

    # f32 path (all chips): tight check against the reference.
    out = value_network_forward(state, params, compute_dtype=jnp.float32)
    out = jax.block_until_ready(out)
    assert out.shape == (batch, 1), out.shape
    assert jnp.allclose(out, ref, atol=1e-5, rtol=1e-5), (out, ref)

    # bf16 operand + bf16 tanh path (v6e/v7x EUP/bandwidth win): loose check.
    out_bf16 = value_network_forward(state, params, compute_dtype=jnp.bfloat16)
    out_bf16 = jax.block_until_ready(out_bf16)
    assert out_bf16.shape == (batch, 1), out_bf16.shape
    assert jnp.allclose(out_bf16, ref, atol=1e-1), (out_bf16, ref)

    print("KERNEL_OK")
</pallas_src>

<mosaic_0001>
module attributes {stable_mosaic.version = 11 : i64} {
  func.func @value_net_kernel(%arg0: i32, %arg1: memref<4x128xf32, #tpu.memory_space<vmem>>, %arg2: memref<32x4xf32, #tpu.memory_space<vmem>>, %arg3: memref<32x1xf32, #tpu.memory_space<vmem>>, %arg4: memref<32x32xf32, #tpu.memory_space<vmem>>, %arg5: memref<32x1xf32, #tpu.memory_space<vmem>>, %arg6: memref<32x1xf32, #tpu.memory_space<vmem>>, %arg7: memref<1x1xf32, #tpu.memory_space<vmem>>, %arg8: memref<1x128xf32, #tpu.memory_space<vmem>>) attributes {dimension_semantics = [#tpu.dimension_semantics<parallel>], iteration_bounds = array<i64: 1>, scalar_prefetch = 0 : i64, scratch_operands = 0 : i64, tpu.core_type = #tpu.core_type<tc>, window_params = [{transform_indices = @transform_0, window_bounds = array<i64: 4, 128>}, {pipeline_mode = #tpu.pipeline_mode<synchronous>, transform_indices = @transform_1, window_bounds = array<i64: 32, 4>}, {pipeline_mode = #tpu.pipeline_mode<synchronous>, transform_indices = @transform_2, window_bounds = array<i64: 32, 1>}, {pipeline_mode = #tpu.pipeline_mode<synchronous>, transform_indices = @transform_3, window_bounds = array<i64: 32, 32>}, {pipeline_mode = #tpu.pipeline_mode<synchronous>, transform_indices = @transform_4, window_bounds = array<i64: 32, 1>}, {pipeline_mode = #tpu.pipeline_mode<synchronous>, transform_indices = @transform_5, window_bounds = array<i64: 32, 1>}, {pipeline_mode = #tpu.pipeline_mode<synchronous>, transform_indices = @transform_6, window_bounds = array<i64: 1, 1>}, {transform_indices = @transform_7, window_bounds = array<i64: 1, 128>}]} {
    %c0 = arith.constant 0 : index
    %c0_0 = arith.constant 0 : index
    %0 = vector.load %arg1[%c0, %c0_0] : memref<4x128xf32, #tpu.memory_space<vmem>>, vector<4x128xf32>
    %c0_1 = arith.constant 0 : index
    %c0_2 = arith.constant 0 : index
    %1 = vector.load %arg2[%c0_1, %c0_2] : memref<32x4xf32, #tpu.memory_space<vmem>>, vector<32x4xf32>
    %cst = arith.constant dense<0.000000e+00> : vector<32x128xf32>
    %2 = tpu.matmul %1, %0, %cst {dimension_numbers = #tpu.dot_dimension_numbers<[1], [0], [0], [1], [0, 0, 1, 1], [], []>} : vector<32x4xf32>, vector<4x128xf32>, vector<32x128xf32> -> vector<32x128xf32>
    %c0_3 = arith.constant 0 : index
    %c0_4 = arith.constant 0 : index
    %3 = vector.load %arg3[%c0_3, %c0_4] : memref<32x1xf32, #tpu.memory_space<vmem>>, vector<32x1xf32>
    %4 = vector.broadcast %3 : vector<32x1xf32> to vector<32x128xf32>
    %5 = arith.addf %2, %4 : vector<32x128xf32>
    %6 = math.tanh %5 : vector<32x128xf32>
    %c0_5 = arith.constant 0 : index
    %c0_6 = arith.constant 0 : index
    %7 = vector.load %arg4[%c0_5, %c0_6] : memref<32x32xf32, #tpu.memory_space<vmem>>, vector<32x32xf32>
    %cst_7 = arith.constant dense<0.000000e+00> : vector<32x128xf32>
    %8 = tpu.matmul %7, %6, %cst_7 {dimension_numbers = #tpu.dot_dimension_numbers<[1], [0], [0], [1], [0, 0, 1, 1], [], []>} : vector<32x32xf32>, vector<32x128xf32>, vector<32x128xf32> -> vector<32x128xf32>
    %c0_8 = arith.constant 0 : index
    %c0_9 = arith.constant 0 : index
    %9 = vector.load %arg5[%c0_8, %c0_9] : memref<32x1xf32, #tpu.memory_space<vmem>>, vector<32x1xf32>
    %10 = vector.broadcast %9 : vector<32x1xf32> to vector<32x128xf32>
    %11 = arith.addf %8, %10 : vector<32x128xf32>
    %12 = math.tanh %11 : vector<32x128xf32>
    %c0_10 = arith.constant 0 : index
    %c0_11 = arith.constant 0 : index
    %13 = vector.load %arg6[%c0_10, %c0_11] : memref<32x1xf32, #tpu.memory_space<vmem>>, vector<32x1xf32>
    %14 = vector.broadcast %13 : vector<32x1xf32> to vector<32x128xf32>
    %15 = arith.mulf %12, %14 : vector<32x128xf32>
    %cst_12 = arith.constant dense<0.000000e+00> : vector<128xf32>
    %16 = vector.multi_reduction <add>, %15, %cst_12 [0] : vector<32x128xf32> to vector<128xf32>
    %17 = vector.shape_cast %16 : vector<128xf32> to vector<1x128xf32>
    %c0_13 = arith.constant 0 : index
    %c0_14 = arith.constant 0 : index
    %18 = vector.load %arg7[%c0_13, %c0_14] : memref<1x1xf32, #tpu.memory_space<vmem>>, vector<1x1xf32>
    %19 = vector.broadcast %18 : vector<1x1xf32> to vector<1x128xf32>
    %20 = arith.addf %17, %19 : vector<1x128xf32>
    %c0_15 = arith.constant 0 : index
    %c0_16 = arith.constant 0 : index
    %21 = vector.load %arg8[%c0_15, %c0_16] : memref<1x128xf32, #tpu.memory_space<vmem>>, vector<1x128xf32>
    tpu.vector_store %arg8[%c0_15, %c0_16], %20 {strides = array<i32>} : memref<1x128xf32, #tpu.memory_space<vmem>>, vector<1x128xf32>,
    return
  }
  func.func @transform_0(%arg0: i32) -> (i32, i32) {
    %c0_i32 = arith.constant 0 : i32
    %c0_i32_0 = arith.constant 0 : i32
    return %c0_i32, %arg0 : i32, i32
  }
  func.func @transform_1(%arg0: i32) -> (i32, i32) {
    %c0_i32 = arith.constant 0 : i32
    %c0_i32_0 = arith.constant 0 : i32
    %c0_i32_1 = arith.constant 0 : i32
    return %c0_i32, %c0_i32_0 : i32, i32
  }
  func.func @transform_2(%arg0: i32) -> (i32, i32) {
    %c0_i32 = arith.constant 0 : i32
    %c0_i32_0 = arith.constant 0 : i32
    %c0_i32_1 = arith.constant 0 : i32
    return %c0_i32, %c0_i32_0 : i32, i32
  }
  func.func @transform_3(%arg0: i32) -> (i32, i32) {
    %c0_i32 = arith.constant 0 : i32
    %c0_i32_0 = arith.constant 0 : i32
    %c0_i32_1 = arith.constant 0 : i32
    return %c0_i32, %c0_i32_0 : i32, i32
  }
  func.func @transform_4(%arg0: i32) -> (i32, i32) {
    %c0_i32 = arith.constant 0 : i32
    %c0_i32_0 = arith.constant 0 : i32
    %c0_i32_1 = arith.constant 0 : i32
    return %c0_i32, %c0_i32_0 : i32, i32
  }
  func.func @transform_5(%arg0: i32) -> (i32, i32) {
    %c0_i32 = arith.constant 0 : i32
    %c0_i32_0 = arith.constant 0 : i32
    %c0_i32_1 = arith.constant 0 : i32
    return %c0_i32, %c0_i32_0 : i32, i32
  }
  func.func @transform_6(%arg0: i32) -> (i32, i32) {
    %c0_i32 = arith.constant 0 : i32
    %c0_i32_0 = arith.constant 0 : i32
    %c0_i32_1 = arith.constant 0 : i32
    return %c0_i32, %c0_i32_0 : i32, i32
  }
  func.func @transform_7(%arg0: i32) -> (i32, i32) {
    %c0_i32 = arith.constant 0 : i32
    %c0_i32_0 = arith.constant 0 : i32
    return %c0_i32, %arg0 : i32, i32
  }
}

</mosaic_0001>

<llo_original>
// kernel: tpu_custom_call.1
$region0: #{tpu_custom_call.1}
  #allocation0 [shape = 'u32[]', space=smem, size = 0x4, offset = 0x4, fixed_abs, tag = 'smem constant byte address 0x4 - core index']
  #allocation1 [shape = 'u32[72,128]{1,0:T(1,128)}', space=vmem, size = 0x9000, scoped, tag = 'internal scratch']
  #allocation2 [shape = 'f32[1,1]{1,0:T(1,128)S(1)}', space=vmem, size = 0x200, scoped, tag = 'scoped memory for tpu_custom_call.1']
  %s0 = inlined_call_operand.vmem [shape: f32[4,128], index: 0, kind: input, shape index: {}]
  %s1 = inlined_call_operand.vmem [shape: f32[32,4], index: 1, kind: input, shape index: {}]
  %s2 = inlined_call_operand.vmem [shape: f32[32,1], index: 2, kind: input, shape index: {}]
  %s3 = inlined_call_operand.vmem [shape: f32[32,32], index: 3, kind: input, shape index: {}]
  %s4 = inlined_call_operand.vmem [shape: f32[32,1], index: 4, kind: input, shape index: {}]
  %s5 = inlined_call_operand.vmem [shape: f32[32,1], index: 5, kind: input, shape index: {}]
  %s6 = inlined_call_operand.<no memory space> [shape: f32[1,1], index: 6, kind: input, shape index: {}]
  %s7 = inlined_call_operand.hbm [shape: f32[1,128], index: 7, kind: output, shape index: {}]
  %s8 = sld [smem:[#allocation0]]
  $region38: #{tpu_custom_call.1} parent=0
    _
  %s10 = ssub.s32 1, %s8
  %s11 = scalar_select 0, %s10, %s8
  %v12 = vstv %s6
  %13 = vst [vmem:[#allocation2] sm:$0x1] %v12
  $region1: #{tpu_custom_call.1} parent=0
    #allocation3 [shape = 'u8[512]{0}', space=vmem, size = 0x400, scoped, tag = 'output window, operand 0, single buffered']
    #allocation4 [shape = 's32[1]{0}', space=sflag, size = 0x4, scoped, tag = 'scoped memory for tpu_custom_call.1']
    %14 = vsyncpa [#allocation4], 0
    // Predicated region
    $region2: #{tpu_custom_call.1} parent=1 // pred_check
      _
    $region3: #{tpu_custom_call.1} parent=1 // pred_check_branch
      %16 = sbr.rel (0) target = $region5
    $region4: #{tpu_custom_call.1} parent=1 // pred_region
      _
    $region5: #{tpu_custom_call.1} parent=1 // pred_fallthru
      _
    // Predicated region
    $region6: #{tpu_custom_call.1} parent=1 // pred_check
      _
    $region7: #{tpu_custom_call.1} parent=1 // pred_check_branch
      %18 = sbr.rel (0) target = $region9
    $region8: #{tpu_custom_call.1} parent=1 // pred_region
      _
    $region9: #{tpu_custom_call.1} parent=1 // pred_fallthru
      _
    // Predicated region
    $region10: #{tpu_custom_call.1} parent=1 // pred_check
      _
    $region11: #{tpu_custom_call.1} parent=1 // pred_check_branch
      %20 = sbr.rel (0) target = $region13
    $region12: #{tpu_custom_call.1} parent=1 // pred_region
      _
    $region13: #{tpu_custom_call.1} parent=1 // pred_fallthru
      _
    // Predicated region
    $region14: #{tpu_custom_call.1} parent=1 // pred_check
      _
    $region15: #{tpu_custom_call.1} parent=1 // pred_check_branch
      %22 = sbr.rel (0) target = $region17
    $region16: #{tpu_custom_call.1} parent=1 // pred_region
      _
    $region17: #{tpu_custom_call.1} parent=1 // pred_fallthru
      _
    // Predicated region
    $region18: #{tpu_custom_call.1} parent=1 // pred_check
      _
    $region19: #{tpu_custom_call.1} parent=1 // pred_check_branch
      %24 = sbr.rel (0) target = $region21
    $region20: #{tpu_custom_call.1} parent=1 // pred_region
      _
    $region21: #{tpu_custom_call.1} parent=1 // pred_fallthru
      _
    // Predicated region
    $region22: #{tpu_custom_call.1} parent=1 // pred_check
      _
    $region23: #{tpu_custom_call.1} parent=1 // pred_check_branch
      %26 = sbr.rel (0) target = $region25
    $region24: #{tpu_custom_call.1} parent=1 // pred_region
      _
    $region25: #{tpu_custom_call.1} parent=1 // pred_fallthru
      _
    // Predicated region
    $region26: #{tpu_custom_call.1} parent=1 // pred_check
      _
    $region27: #{tpu_custom_call.1} parent=1 // pred_check_branch
      %28 = sbr.rel (0) target = $region29
    $region28: #{tpu_custom_call.1} parent=1 // pred_region
      _
    $region29: #{tpu_custom_call.1} parent=1 // pred_fallthru
      _
    %v29 = vld [vmem:[%s0] sm:$0xf]
    %v30 = vld [vmem:[%s1] sm:$0xff]
    %v31 = vld [vmem:[%s1 + $0x8] sm:$0xff]
    %v32 = vld [vmem:[%s1 + $0x10] sm:$0xff]
    %v33 = vld [vmem:[%s1 + $0x18] sm:$0xff]
    %v34 = vld [vmem:[%s2] sm:$0xff]
    %v35 = vld [vmem:[%s2 + $0x8] sm:$0xff]
    %v36 = vld [vmem:[%s2 + $0x10] sm:$0xff]
    %v37 = vld [vmem:[%s2 + $0x18] sm:$0xff]
    %39 = vset.pattern.permute.xlu0 0
    %40 = vperm.xlu0 %39, %v34
    %v41 = vpop.permute.xlu0 %40
    %44 = vset.pattern.permute.xlu0 0
    %45 = vperm.xlu0 %44, %v35
    %v46 = vpop.permute.xlu0 %45
    %49 = vset.pattern.permute.xlu0 0
    %50 = vperm.xlu0 %49, %v36
    %v51 = vpop.permute.xlu0 %50
    %54 = vset.pattern.permute.xlu0 0
    %55 = vperm.xlu0 %54, %v37
    %v56 = vpop.permute.xlu0 %55
    %vm58 = vcmask 31744
    %v60 = vsel %vm58, %v30, 0
    %v63 = vsel %vm58, %v31, 0
    %v66 = vsel %vm58, %v32, 0
    %v69 = vsel %vm58, %v33, 0
    %vm71 = vcmask 1043456
    %v73 = vsel %vm71, %v29, 0
    %75 = vmatpush.msra.mxu0 0.0
    %76 = vmatpush.msra.mxu0 0.0
    %77 = vmatpush.msra.mxu0 0.0
    %78 = vmatpush.msra.mxu0 0.0
    %79 = vmatpush.msra.mxu0 0.0
    %80 = vmatpush.msra.mxu0 0.0
    %81 = vmatpush.msra.mxu0 0.0
    %82 = vmatpush.msra.mxu0 0.0
    %83 = vmatpush.msra.mxu0 0.0
    %84 = vmatpush.msra.mxu0 0.0
    %85 = vmatpush.msra.mxu0 0.0
    %86 = vmatpush.msra.mxu0 0.0
    %87 = vmatpush.msra.mxu0 0.0
    %88 = vmatpush.msra.mxu0 0.0
    %89 = vmatpush.msra.mxu0 0.0
    %90 = vmatpush.msra.mxu0 %v73
    %91 = vmatmul.f32.gmra.mxu0 %v60
    %v92 = vpop.f32.mrf.mxu0
    %v93 = vadd.f32 %v41, %v92
    %94 = vmatmul.f32.gmra.mxu0 %v63
    %v95 = vpop.f32.mrf.mxu0
    %v96 = vadd.f32 %v46, %v95
    %97 = vmatmul.f32.gmra.mxu0 %v66
    %v98 = vpop.f32.mrf.mxu0
    %v99 = vadd.f32 %v51, %v98
    %100 = vmatmul.f32.gmra.mxu0 %v69
    %v101 = vpop.f32.mrf.mxu0
    %v102 = vadd.f32 %v56, %v101
    %103 = vdwg.mxu0
    %v104 = vtanh.pop %v93
    %v105 = vtanh.pop %v96
    %v106 = vtanh.pop %v99
    %v107 = vtanh.pop %v102
    %v108 = vld [vmem:[%s3] sm:$0xff]
    %v109 = vld [vmem:[%s3 + $0x8] sm:$0xff]
    %v110 = vld [vmem:[%s3 + $0x10] sm:$0xff]
    %v111 = vld [vmem:[%s3 + $0x18] sm:$0xff]
    %v112 = vld [vmem:[%s4] sm:$0xff]
    %v113 = vld [vmem:[%s4 + $0x8] sm:$0xff]
    %v114 = vld [vmem:[%s4 + $0x10] sm:$0xff]
    %v115 = vld [vmem:[%s4 + $0x18] sm:$0xff]
    %117 = vset.pattern.permute.xlu0 0
    %118 = vperm.xlu0 %117, %v112
    %v119 = vpop.permute.xlu0 %118
    %122 = vset.pattern.permute.xlu0 0
    %123 = vperm.xlu0 %122, %v113
    %v124 = vpop.permute.xlu0 %123
    %127 = vset.pattern.permute.xlu0 0
    %128 = vperm.xlu0 %127, %v114
    %v129 = vpop.permute.xlu0 %128
    %132 = vset.pattern.permute.xlu0 0
    %133 = vperm.xlu0 %132, %v115
    %v134 = vpop.permute.xlu0 %133
    %vm136 = vcmask 261120
    %v138 = vsel %vm136, %v108, 0
    %v141 = vsel %vm136, %v109, 0
    %v144 = vsel %vm136, %v110, 0
    %v147 = vsel %vm136, %v111, 0
    %149 = vmatpush.msra.mxu0 0.0
    %150 = vmatpush.msra.mxu0 0.0
    %151 = vmatpush.msra.mxu0 0.0
    %152 = vmatpush.msra.mxu0 0.0
    %153 = vmatpush.msra.mxu0 0.0
    %154 = vmatpush.msra.mxu0 0.0
    %155 = vmatpush.msra.mxu0 0.0
    %156 = vmatpush.msra.mxu0 0.0
    %157 = vmatpush.msra.mxu0 0.0
    %158 = vmatpush.msra.mxu0 0.0
    %159 = vmatpush.msra.mxu0 0.0
    %160 = vmatpush.msra.mxu0 0.0
    %161 = vmatpush.msra.mxu0 %v107
    %162 = vmatpush.msra.mxu0 %v106
    %163 = vmatpush.msra.mxu0 %v105
    %164 = vmatpush.msra.mxu0 %v104
    %165 = vmatmul.f32.gmra.mxu0 %v138
    %v166 = vpop.f32.mrf.mxu0
    %v167 = vadd.f32 %v119, %v166
    %168 = vmatmul.f32.gmra.mxu0 %v141
    %v169 = vpop.f32.mrf.mxu0
    %v170 = vadd.f32 %v124, %v169
    %171 = vmatmul.f32.gmra.mxu0 %v144
    %v172 = vpop.f32.mrf.mxu0
    %v173 = vadd.f32 %v129, %v172
    %174 = vmatmul.f32.gmra.mxu0 %v147
    %v175 = vpop.f32.mrf.mxu0
    %v176 = vadd.f32 %v134, %v175
    %177 = vdwg.mxu0
    %v178 = vtanh.pop %v167
    %v179 = vtanh.pop %v170
    %v180 = vtanh.pop %v173
    %v181 = vtanh.pop %v176
    %v182 = vld [vmem:[%s5] sm:$0xff]
    %v183 = vld [vmem:[%s5 + $0x8] sm:$0xff]
    %v184 = vld [vmem:[%s5 + $0x10] sm:$0xff]
    %v185 = vld [vmem:[%s5 + $0x18] sm:$0xff]
    %187 = vset.pattern.permute.xlu0 0
    %188 = vperm.xlu0 %187, %v182
    %v189 = vpop.permute.xlu0 %188
    %192 = vset.pattern.permute.xlu0 0
    %193 = vperm.xlu0 %192, %v183
    %v194 = vpop.permute.xlu0 %193
    %197 = vset.pattern.permute.xlu0 0
    %198 = vperm.xlu0 %197, %v184
    %v199 = vpop.permute.xlu0 %198
    %202 = vset.pattern.permute.xlu0 0
    %203 = vperm.xlu0 %202, %v185
    %v204 = vpop.permute.xlu0 %203
    %v206 = vmul.f32 %v178, %v189
    %v207 = vmul.f32 %v179, %v194
    %v208 = vmul.f32 %v180, %v199
    %v209 = vmul.f32 %v181, %v204
    %v210 = vadd.f32 %v206, %v207
    %v211 = vadd.f32 %v210, %v208
    %v212 = vadd.f32 %v211, %v209
    %v213 = vrot.slane %v212, 4
    %v214 = vadd.f32 %v212, %v213
    %v215 = vrot.slane %v214, 2
    %v216 = vadd.f32 %v214, %v215
    %v217 = vrot.slane %v216, 1
    %v218 = vadd.f32 %v216, %v217
    %v219 = vld [vmem:[#allocation2] sm:$0x1]
    %221 = vset.pattern.permute.xlu0 0
    %222 = vperm.xlu0 %221, %v219
    %v223 = vpop.permute.xlu0 %222
    %v225 = vperm.slane %v223, 0
    %v226 = vadd.f32 %v218, %v225
    %227 = vst [vmem:[#allocation3] sm:$0x1] %v226
    // Predicated region
    $region30: #{tpu_custom_call.1} parent=1 // pred_check
      _
    $region31: #{tpu_custom_call.1} parent=1 // pred_check_branch
      %229 = sbr.rel (0) target = $region33
    $region32: #{tpu_custom_call.1} parent=1 // pred_region
      %231 = vsyncadd [#allocation4], 0
      %s233 = sshll.u32 [#allocation3], 4
      %s234 = int_to_ptr.vmem [resolvable:$true] %s233
      %s235 = sshll.u32 %s7, 4
      %s236 = int_to_ptr.hbm [resolvable:$true] %s235
      %238 = dma.vmem_to_hbm [thread:$0]  %s234, 16, %s236, [#allocation4]
    $region33: #{tpu_custom_call.1} parent=1 // pred_fallthru
      _
    // Predicated region
    $region34: #{tpu_custom_call.1} parent=1 // pred_check
      _
    $region35: #{tpu_custom_call.1} parent=1 // pred_check_branch
      %240 = sbr.rel (0) target = $region37
    $region36: #{tpu_custom_call.1} parent=1 // pred_region
      %242 = dma.done [#allocation4], 16
    $region37: #{tpu_custom_call.1} parent=1 // pred_fallthru
      _
    %243 = vsyncpa [#allocation4], 1

</llo_original>
